<compile_context>
chip_gen: v7x
topology: tpu7x:2x2x1
jax: 0.10.0
libtpu: 0.0.40
codegen_flags: <defaults>
</compile_context>

<pallas_src>
import numpy as np
import jax
import jax.numpy as jnp
from jax.experimental import pallas as pl
from jax.experimental.pallas import tpu as pltpu


_LANE = 128
_SUB = 16                      # sublane padding covering both f32 (8) and bf16 (16)


def _round_up(x, m):
    return ((x + m - 1) // m) * m


def _round_down(x, m):
    return (x // m) * m


def _cdiv(a, b):
    return -(-a // b)


def _vmem_sizing():
    """Per-generation VMEM (budget for block sizing, scoped limit for Mosaic)."""
    try:
        info = pltpu.get_tpu_info()
        vmem = int(getattr(info, "vmem_capacity_bytes", 0)) or (64 << 20)
    except Exception:
        vmem = 64 << 20        # conservative fallback: v7x per-TC VMEM
    limit = min(vmem * 3 // 4, 100 << 20)   # v7x: 48 MiB, v5e/v6e: 96 MiB
    budget = min(vmem // 2, 64 << 20)       # v7x: 32 MiB, v5e/v6e: 64 MiB
    return budget, limit


_VMEM_BUDGET, _VMEM_LIMIT = _vmem_sizing()


# ----------------------------------------------------------------------------
# Plain-python / numpy glue reproducing rs.convention / kernel_linear structure
# ----------------------------------------------------------------------------
def rs_convention(Rs):
    return [(int(mul), int(l), int(p)) for (mul, l, p) in Rs]


def rs_dim(Rs):
    return sum(mul * (2 * l + 1) for mul, l, p in Rs)


def check_input_output(Rs_in, Rs_out):
    for _, l_out, p_out in Rs_out:
        if not any((l_in, p_in) == (l_out, p_out) for _, l_in, p_in in Rs_in):
            raise ValueError(f"output (l={l_out}, p={p_out}) cannot be generated")
    for _, l_in, p_in in Rs_in:
        if not any((l_in, p_in) == (l_out, p_out) for _, l_out, p_out in Rs_out):
            raise ValueError(f"input (l={l_in}, p={p_in}) cannot be used")


def build_Q(Rs_in, Rs_out):
    """Mixing tensor Q of shape [dim_out, dim_in, n_path] (numpy).

    One scalar path per (mul_out, mul_in) pair for each matching (l, parity)
    block, with the Wigner-3j (l, l, 0) coefficient delta_{m m'} / sqrt(2l+1).
    """
    # TODO(synk): exact e3nn 'component' normalization constants not reproduced;
    # block-identity structure with 1/sqrt(2l+1) Wigner factor is used instead.
    dim_in, dim_out = rs_dim(Rs_in), rs_dim(Rs_out)
    blocks = []
    out_off = 0
    for mul_out, l_out, p_out in Rs_out:
        in_off = 0
        for mul_in, l_in, p_in in Rs_in:
            if l_in == l_out and p_out in (0, p_in):  # selection_rule -> l_f = 0
                blocks.append((out_off, in_off, mul_out, mul_in, l_out))
            in_off += mul_in * (2 * l_in + 1)
        out_off += mul_out * (2 * l_out + 1)

    n_path = sum(mo * mi for _, _, mo, mi, _ in blocks)
    Q = np.zeros((dim_out, dim_in, max(n_path, 1)), dtype=np.float32)
    k = 0
    for oo, io, mo, mi, l in blocks:
        d = 2 * l + 1
        norm = 1.0 / np.sqrt(d)
        for u in range(mo):
            for v in range(mi):
                for m in range(d):
                    Q[oo + u * d + m, io + v * d + m, k] = norm
                k += 1
    return Q


# ----------------------------------------------------------------------------
# Kernel 1: K_T construction as a lane-dense MXU matvec in compute_dtype
#   Q2d[k, j*dim_out_p + i] = Q_padded[i, j, k]
#   K_T_flat = w_row @ Q2d        -> reshape to (dim_in, dim_out_p)
# ----------------------------------------------------------------------------
def _kT_matvec_kernel(w_ref, q_ref, o_ref):
    # w_ref: (1, n_path_p)   q_ref: (n_path_p, tile_col)   o_ref: (1, tile_col)
    o_ref[...] = jnp.dot(w_ref[...], q_ref[...],
                         preferred_element_type=jnp.float32).astype(o_ref.dtype)


def kernel_linear_matrix_T(Q2d, weight_row, dim_in, dim_out_p):
    """Return K_T of shape (dim_in, dim_out_p) in Q2d.dtype (no extra cast pass)."""
    n_path_p, D = Q2d.shape
    q_bytes = Q2d.dtype.itemsize
    # VMEM-budget-derived column tile: double-buffered Q2d block + out block.
    per_col = 2 * n_path_p * q_bytes + 2 * _SUB * q_bytes
    tile_col = max(_LANE, _round_down(_VMEM_BUDGET // per_col, _LANE))
    tile_col = min(tile_col, D)
    # TODO(synk): exploit Q's block sparsity (skip all-zero column tiles via a
    # prefetched nonzero-path table) instead of dense streaming of Q2d.
    kT_flat = pl.pallas_call(
        _kT_matvec_kernel,
        out_shape=jax.ShapeDtypeStruct((1, D), Q2d.dtype),
        grid=(_cdiv(D, tile_col),),
        in_specs=[
            pl.BlockSpec((1, n_path_p), lambda i: (0, 0)),
            pl.BlockSpec((n_path_p, tile_col), lambda i: (0, i)),
        ],
        out_specs=pl.BlockSpec((1, tile_col), lambda i: (0, i)),
        compiler_params=pltpu.CompilerParams(
            dimension_semantics=("parallel",),
            vmem_limit_bytes=_VMEM_LIMIT,
        ),
    )(weight_row, Q2d)
    return kT_flat.reshape(dim_in, dim_out_p)


# ----------------------------------------------------------------------------
# Kernel 2: apply GEMM, features read unpadded/uncast from HBM, K_T resident
# (or column-tiled when it would overflow the VMEM budget)
# ----------------------------------------------------------------------------
def _apply_kernel(x_ref, kT_ref, o_ref):
    # x_ref: (tile_z, dim_in) in the feature dtype; cast in VMEM (VPU, free in a
    # memory-bound kernel).  kT_ref: (dim_in, tile_n).  MXU accumulates in f32.
    x = x_ref[...].astype(kT_ref.dtype)
    o_ref[...] = jnp.dot(x, kT_ref[...],
                         preferred_element_type=jnp.float32).astype(o_ref.dtype)


def linear_apply(features, K_T, dim_out):
    *size, dim_in = features.shape
    dim_in_k, dim_out_p = K_T.shape
    assert dim_in_k == dim_in
    x2d = features.reshape(-1, dim_in)
    Z = x2d.shape[0]

    x_bytes = x2d.dtype.itemsize
    kt_bytes = K_T.dtype.itemsize
    out_dtype = K_T.dtype
    out_bytes = out_dtype.itemsize

    dim_in_l = _round_up(dim_in, _LANE)   # lane-padded VMEM footprint of x block
    dim_in_s = _round_up(dim_in, _SUB)    # sublane-padded footprint of K_T block

    # Guard the "K_T resident" assumption: tile its columns until the
    # (double-buffer-accounted) block fits half the per-generation budget.
    tile_n = dim_out_p
    while tile_n > _LANE and 2 * dim_in_s * tile_n * kt_bytes > _VMEM_BUDGET // 2:
        tile_n = _round_up(tile_n // 2, _LANE)
    # TODO(synk): for extremely large dim_in (K_T column tile still over budget),
    # additionally tile dim_in with an f32 accumulator and an "arbitrary" K axis.

    k_vmem = 2 * dim_in_s * tile_n * kt_bytes
    per_row = 2 * dim_in_l * x_bytes + 2 * tile_n * out_bytes
    max_rows = max(8, (_VMEM_BUDGET - k_vmem) // per_row)

    z_cap = max(8, _round_down(Z, 8))               # keep blocks <= array extent
    tile_z = int(min(4096, max_rows, z_cap))
    if Z > 16:
        # >= 2 Z-steps so dimension_semantics="parallel" can shard across the two
        # TensorCores on v7x (harmless one extra step on single-TC v5e/v6e).
        tile_z = min(tile_z, _round_up(_cdiv(Z, 2), 8))
    tile_z = max(8, _round_down(tile_z, 8))

    grid = (_cdiv(Z, tile_z), _cdiv(dim_out_p, tile_n))

    cost = pl.CostEstimate(
        flops=2 * Z * dim_in * dim_out_p,
        transcendentals=0,
        bytes_accessed=Z * dim_in * x_bytes
                       + dim_in * dim_out_p * kt_bytes
                       + Z * dim_out_p * out_bytes,
    )

    out_pad = pl.pallas_call(
        _apply_kernel,
        out_shape=jax.ShapeDtypeStruct((Z, dim_out_p), out_dtype),
        grid=grid,
        in_specs=[
            # x unpadded: full-extent lane block, no HBM pad/cast pass.
            pl.BlockSpec((tile_z, dim_in), lambda i, j: (i, 0)),
            # K_T: resident when grid[1] == 1, otherwise column-tiled.
            pl.BlockSpec((dim_in, tile_n), lambda i, j: (0, j)),
        ],
        out_specs=pl.BlockSpec((tile_z, tile_n), lambda i, j: (i, j)),
        compiler_params=pltpu.CompilerParams(
            dimension_semantics=("parallel", "parallel"),
            vmem_limit_bytes=_VMEM_LIMIT,
        ),
        cost_estimate=cost,
    )(x2d, K_T)

    out = out_pad[:, :dim_out].astype(features.dtype)
    return out.reshape(*size, dim_out)


# ----------------------------------------------------------------------------
class LinearPallas:
    """JAX/Pallas port of the e3nn Linear module.

    Use compute_dtype=jnp.float32 for parity testing against an f32 reference;
    the default bf16 path trades ~<1% relative error for ~2x less HBM traffic.
    """

    def __init__(self, Rs_in, Rs_out, key, compute_dtype=jnp.bfloat16):
        self.Rs_in = rs_convention(Rs_in)
        self.Rs_out = rs_convention(Rs_out)
        check_input_output(self.Rs_in, self.Rs_out)
        self.compute_dtype = compute_dtype

        Q_np = build_Q(self.Rs_in, self.Rs_out)      # (dim_out, dim_in, n_path)
        self.Q = jnp.asarray(Q_np)                   # kept for reference checks
        dim_out, dim_in, n_path = Q_np.shape
        self.dim_in, self.dim_out, self.n_path = dim_in, dim_out, n_path

        self.dim_out_p = _round_up(dim_out, _LANE)   # lane-dense output columns
        self.n_path_p = _round_up(n_path, _SUB)

        # Pre-transposed, padded (dim_out & n_path only -- dim_in kept exact so
        # the apply GEMM consumes unpadded features), flattened mixing tensor:
        #   Q2d[k, j*dim_out_p + i] = Q[i, j, k]
        Q_pad = np.zeros((self.dim_out_p, dim_in, self.n_path_p), dtype=np.float32)
        Q_pad[:dim_out, :, :n_path] = Q_np
        Q2d = Q_pad.transpose(1, 0, 2).reshape(
            dim_in * self.dim_out_p, self.n_path_p).T
        # Stored in compute_dtype: halves kernel-1 HBM streaming when bf16.
        self.Q2d = jnp.asarray(np.ascontiguousarray(Q2d), dtype=compute_dtype)

        self.weight = jax.random.normal(key, (n_path,), dtype=jnp.float32)

        # K_T is feature-independent: cache it and rebuild only on weight change.
        self._kT_cache = None
        self._kT_weight = None

    def kernel_matrix_T(self):
        if self._kT_cache is None or self._kT_weight is not self.weight:
            w_row = jnp.zeros((1, self.n_path_p), self.compute_dtype)
            w_row = w_row.at[0, :self.n_path].set(
                self.weight.astype(self.compute_dtype))
            self._kT_cache = kernel_linear_matrix_T(
                self.Q2d, w_row, self.dim_in, self.dim_out_p)         # Pallas #1
            self._kT_weight = self.weight
        return self._kT_cache

    def __call__(self, features):
        return linear_apply(features, self.kernel_matrix_T(), self.dim_out)  # Pallas #2


# ----------------------------------------------------------------------------
if __name__ == "__main__":
    Rs_in = [(2, 0, 1), (3, 1, 1)]    # dim_in  = 2*1 + 3*3 = 11
    Rs_out = [(4, 0, 1), (2, 1, 1)]   # dim_out = 4*1 + 2*3 = 10

    key = jax.random.PRNGKey(0)
    k_w, k_x = jax.random.split(key)

    lin = LinearPallas(Rs_in, Rs_out, k_w)

    dim_in = rs_dim(lin.Rs_in)
    features = jax.random.normal(k_x, (2, 5, dim_in), dtype=jnp.float32)

    out = lin(features)
    out = jax.block_until_ready(out)

    # pure-JAX reference check (end-to-end bf16 weights/Q/K_T/features in the
    # kernels -> loosened tolerance; use compute_dtype=float32 for parity)
    K_ref = jnp.einsum('ijk,k->ij', lin.Q, lin.weight)
    out_ref = jnp.einsum('ij,...j->...i', K_ref, features)
    assert out.shape == (2, 5, rs_dim(lin.Rs_out))
    assert out.dtype == features.dtype
    np.testing.assert_allclose(np.asarray(out), np.asarray(out_ref),
                               rtol=2e-2, atol=5e-2)

    print("KERNEL_OK")
</pallas_src>

<mosaic_0001>
module attributes {stable_mosaic.version = 11 : i64} {
  func.func @_kT_matvec_kernel(%arg0: i32, %arg1: memref<1x16xbf16, #tpu.memory_space<vmem>>, %arg2: memref<16x1408xbf16, #tpu.memory_space<vmem>>, %arg3: memref<1x1408xbf16, #tpu.memory_space<vmem>>) attributes {dimension_semantics = [#tpu.dimension_semantics<parallel>], iteration_bounds = array<i64: 1>, scalar_prefetch = 0 : i64, scratch_operands = 0 : i64, tpu.core_type = #tpu.core_type<tc>, window_params = [{pipeline_mode = #tpu.pipeline_mode<synchronous>, transform_indices = @transform_0, window_bounds = array<i64: 1, 16>}, {transform_indices = @transform_1, window_bounds = array<i64: 16, 1408>}, {transform_indices = @transform_2, window_bounds = array<i64: 1, 1408>}]} {
    %c0 = arith.constant 0 : index
    %c0_0 = arith.constant 0 : index
    %0 = vector.load %arg1[%c0, %c0_0] : memref<1x16xbf16, #tpu.memory_space<vmem>>, vector<1x16xbf16>
    %c0_1 = arith.constant 0 : index
    %c0_2 = arith.constant 0 : index
    %1 = vector.load %arg2[%c0_1, %c0_2] : memref<16x1408xbf16, #tpu.memory_space<vmem>>, vector<16x1408xbf16>
    %cst = arith.constant dense<0.000000e+00> : vector<1x1408xf32>
    %2 = tpu.matmul %0, %1, %cst {dimension_numbers = #tpu.dot_dimension_numbers<[1], [0], [0], [1], [0, 0, 1, 1], [], []>} : vector<1x16xbf16>, vector<16x1408xbf16>, vector<1x1408xf32> -> vector<1x1408xf32>
    %3 = arith.truncf %2 : vector<1x1408xf32> to vector<1x1408xbf16>
    %c0_3 = arith.constant 0 : index
    %c0_4 = arith.constant 0 : index
    %4 = vector.load %arg3[%c0_3, %c0_4] : memref<1x1408xbf16, #tpu.memory_space<vmem>>, vector<1x1408xbf16>
    tpu.vector_store %arg3[%c0_3, %c0_4], %3 {strides = array<i32>} : memref<1x1408xbf16, #tpu.memory_space<vmem>>, vector<1x1408xbf16>,
    return
  }
  func.func @transform_0(%arg0: i32) -> (i32, i32) {
    %c0_i32 = arith.constant 0 : i32
    %c0_i32_0 = arith.constant 0 : i32
    %c0_i32_1 = arith.constant 0 : i32
    return %c0_i32, %c0_i32_0 : i32, i32
  }
  func.func @transform_1(%arg0: i32) -> (i32, i32) {
    %c0_i32 = arith.constant 0 : i32
    %c0_i32_0 = arith.constant 0 : i32
    return %c0_i32, %arg0 : i32, i32
  }
  func.func @transform_2(%arg0: i32) -> (i32, i32) {
    %c0_i32 = arith.constant 0 : i32
    %c0_i32_0 = arith.constant 0 : i32
    return %c0_i32, %arg0 : i32, i32
  }
}

</mosaic_0001>

<llo_original>
// kernel: tpu_custom_call.1
$region0: #{tpu_custom_call.1}
  #allocation0 [shape = 'u32[]', space=smem, size = 0x4, offset = 0x4, fixed_abs, tag = 'smem constant byte address 0x4 - core index']
  #allocation1 [shape = 'u32[144,128]{1,0:T(1,128)}', space=vmem, size = 0x12000, scoped, tag = 'internal scratch']
  %s0 = inlined_call_operand.hbm [shape: bf16[1,16], index: 0, kind: input, shape index: {}]
  %s1 = inlined_call_operand.hbm [shape: bf16[16,1408], index: 1, kind: input, shape index: {}]
  %s2 = inlined_call_operand.hbm [shape: bf16[1,1408], index: 2, kind: output, shape index: {}]
  %s3 = sld [smem:[#allocation0]]
  $region26: #{tpu_custom_call.1} parent=0
    _
  %s5 = ssub.s32 1, %s3
  %s6 = scalar_select 0, %s5, %s3
  $region1: #{tpu_custom_call.1} parent=0
    #allocation2 [shape = 'u8[512]{0}', space=vmem, size = 0x400, scoped, tag = 'input window, operand 0, single buffered']
    #allocation3 [shape = 's32[1]{0}', space=sflag, size = 0x4, scoped, tag = 'scoped memory for tpu_custom_call.1']
    #allocation4 [shape = 's32[1]{0}', space=sflag, size = 0x4, scoped, tag = 'scoped memory for tpu_custom_call.1']
    #allocation5 [shape = 'u8[45056]{0}', space=vmem, size = 0xb000, scoped, tag = 'input window, operand 1, single buffered']
    #allocation6 [shape = 's32[1]{0}', space=sflag, size = 0x4, scoped, tag = 'scoped memory for tpu_custom_call.1']
    #allocation7 [shape = 'u8[5632]{0}', space=vmem, size = 0x1800, scoped, tag = 'output window, operand 0, single buffered']
    %7 = vsyncpa [#allocation3], 0
    %8 = vsyncpa [#allocation6], 0
    %9 = vsyncpa [#allocation4], 0
    // Predicated region
    $region2: #{tpu_custom_call.1} parent=1 // pred_check
      _
    $region3: #{tpu_custom_call.1} parent=1 // pred_check_branch
      %11 = sbr.rel (0) target = $region5
    $region4: #{tpu_custom_call.1} parent=1 // pred_region
      %s13 = ssub.s32 16, 16
      %14 = vsyncadd [#allocation3], %s13
      %s16 = sshll.u32 [#allocation2], 4
      %s17 = int_to_ptr.vmem [resolvable:$true] %s16
      %19 = dma.hbm_to_vmem [thread:$0]  %s0, 16, %s17, [#allocation3]
    $region5: #{tpu_custom_call.1} parent=1 // pred_fallthru
      _
    // Predicated region
    $region6: #{tpu_custom_call.1} parent=1 // pred_check
      _
    $region7: #{tpu_custom_call.1} parent=1 // pred_check_branch
      %21 = sbr.rel (0) target = $region9
    $region8: #{tpu_custom_call.1} parent=1 // pred_region
      %s23 = ssub.s32 1408, 1408
      %24 = vsyncadd [#allocation6], %s23
      %s25 = sshll.u32 [#allocation5], 4
      %s26 = int_to_ptr.vmem [resolvable:$true] %s25
      %31 = dma.hbm_to_vmem [thread:$0]  %s1, 1408, %s26, [#allocation6], 704, 704, 44
    $region9: #{tpu_custom_call.1} parent=1 // pred_fallthru
      _
    // Predicated region
    $region10: #{tpu_custom_call.1} parent=1 // pred_check
      _
    $region11: #{tpu_custom_call.1} parent=1 // pred_check_branch
      %33 = sbr.rel (0) target = $region13
    $region12: #{tpu_custom_call.1} parent=1 // pred_region
      %34 = dma.done [#allocation3], 16
    $region13: #{tpu_custom_call.1} parent=1 // pred_fallthru
      _
    // Predicated region
    $region14: #{tpu_custom_call.1} parent=1 // pred_check
      _
    $region15: #{tpu_custom_call.1} parent=1 // pred_check_branch
      %36 = sbr.rel (0) target = $region17
    $region16: #{tpu_custom_call.1} parent=1 // pred_region
      %37 = dma.done [#allocation6], 1408
    $region17: #{tpu_custom_call.1} parent=1 // pred_fallthru
      _
    %v39 = vld [vmem:[#allocation2] sm:$0x1]
    %v40 = vld [vmem:[#allocation5] sm:$0xff]
    %v41 = vld [vmem:[#allocation5 + $0x8] sm:$0xff]
    %v42 = vld [vmem:[#allocation5 + $0x10] sm:$0xff]
    %v43 = vld [vmem:[#allocation5 + $0x18] sm:$0xff]
    %v44 = vld [vmem:[#allocation5 + $0x20] sm:$0xff]
    %v45 = vld [vmem:[#allocation5 + $0x28] sm:$0xf]
    %v46 = vld [vmem:[#allocation5 + $0x2c] sm:$0xff]
    %v47 = vld [vmem:[#allocation5 + $0x34] sm:$0xff]
    %v48 = vld [vmem:[#allocation5 + $0x3c] sm:$0xff]
    %v49 = vld [vmem:[#allocation5 + $0x44] sm:$0xff]
    %v50 = vld [vmem:[#allocation5 + $0x4c] sm:$0xff]
    %v51 = vld [vmem:[#allocation5 + $0x54] sm:$0xf]
    %v64 = vunpack.c.l.b16 %v40
    %v65 = vunpack.c.h.b16 %v40
    %v66 = vunpack.c.l.b16 %v41
    %v67 = vunpack.c.h.b16 %v41
    %v68 = vunpack.c.l.b16 %v42
    %v69 = vunpack.c.h.b16 %v42
    %v70 = vunpack.c.l.b16 %v43
    %v71 = vunpack.c.h.b16 %v43
    %v72 = vunpack.c.l.b16 %v44
    %v73 = vunpack.c.h.b16 %v44
    %v74 = vunpack.c.l.b16 %v45
    %v75 = vunpack.c.l.b16 %v46
    %v76 = vunpack.c.h.b16 %v46
    %v77 = vunpack.c.l.b16 %v47
    %v78 = vunpack.c.h.b16 %v47
    %v79 = vunpack.c.l.b16 %v48
    %v80 = vunpack.c.h.b16 %v48
    %v81 = vunpack.c.l.b16 %v49
    %v82 = vunpack.c.h.b16 %v49
    %v83 = vunpack.c.l.b16 %v50
    %v84 = vunpack.c.h.b16 %v50
    %v85 = vunpack.c.l.b16 %v51
    %v86 = vpack.c.b16 %v75, %v64
    %v87 = vpack.c.b16 %v76, %v65
    %v88 = vpack.c.b16 %v77, %v66
    %v89 = vpack.c.b16 %v78, %v67
    %v90 = vpack.c.b16 %v79, %v68
    %v91 = vpack.c.b16 %v80, %v69
    %v92 = vpack.c.b16 %v81, %v70
    %v93 = vpack.c.b16 %v82, %v71
    %v94 = vpack.c.b16 %v83, %v72
    %v95 = vpack.c.b16 %v84, %v73
    %v96 = vpack.c.b16 %v85, %v74
    %vm108 = vcmask 130048
    %v110 = vsel %vm108, %v39, 0
    %112 = vmatprep.subr.bf16.mxu0 %v87
    %113 = vmatpush1.bf16.msra.mxu0 %v86
    %114 = vmatprep.subr.bf16.mxu0 0
    %115 = vmatpush1.bf16.msra.mxu0 0
    %116 = vmatprep.subr.bf16.mxu0 0
    %117 = vmatpush1.bf16.msra.mxu0 0
    %118 = vmatprep.subr.bf16.mxu0 0
    %119 = vmatpush1.bf16.msra.mxu0 0
    %120 = vmatprep.subr.bf16.mxu0 0
    %121 = vmatpush1.bf16.msra.mxu0 0
    %122 = vmatprep.subr.bf16.mxu0 0
    %123 = vmatpush1.bf16.msra.mxu0 0
    %124 = vmatprep.subr.bf16.mxu0 0
    %125 = vmatpush1.bf16.msra.mxu0 0
    %126 = vmatprep.subr.bf16.mxu0 0
    %127 = vmatpush1.bf16.msra.mxu0 0
    %128 = vmatprep.subr.bf16.mxu0 0
    %129 = vmatpush1.bf16.msra.mxu0 0
    %130 = vmatprep.subr.bf16.mxu0 0
    %131 = vmatpush1.bf16.msra.mxu0 0
    %132 = vmatprep.subr.bf16.mxu0 0
    %133 = vmatpush1.bf16.msra.mxu0 0
    %134 = vmatprep.subr.bf16.mxu0 0
    %135 = vmatpush1.bf16.msra.mxu0 0
    %136 = vmatprep.subr.bf16.mxu0 0
    %137 = vmatpush1.bf16.msra.mxu0 0
    %138 = vmatprep.subr.bf16.mxu0 0
    %139 = vmatpush1.bf16.msra.mxu0 0
    %140 = vmatprep.subr.bf16.mxu0 0
    %141 = vmatpush1.bf16.msra.mxu0 0
    %142 = vmatprep.subr.bf16.mxu0 0
    %143 = vmatpush1.bf16.msra.mxu0 0
    %144 = vmatprep.mubr.bf16.mxu0 0
    %145 = vmatmul.mubr.bf16.gmra.mrb[0].mxu0 %v110
    %v146 = vpop.f32.mrb[0].mxu0
    %v147 = vadd.f32 0.0, %v146
    %v148 = vpop.f32.mrb[0].mxu0
    %v149 = vadd.f32 0.0, %v148
    %v150 = vpop.f32.mrb[0].mxu0
    %v151 = vpop.f32.mrb[0].mxu0
    %152 = vdwg.mxu0
    %153 = vmatprep.subr.bf16.mxu0 %v89
    %154 = vmatpush1.bf16.msra.mxu0 %v88
    %155 = vmatprep.subr.bf16.mxu0 0
    %156 = vmatpush1.bf16.msra.mxu0 0
    %157 = vmatprep.subr.bf16.mxu0 0
    %158 = vmatpush1.bf16.msra.mxu0 0
    %159 = vmatprep.subr.bf16.mxu0 0
    %160 = vmatpush1.bf16.msra.mxu0 0
    %161 = vmatprep.subr.bf16.mxu0 0
    %162 = vmatpush1.bf16.msra.mxu0 0
    %163 = vmatprep.subr.bf16.mxu0 0
    %164 = vmatpush1.bf16.msra.mxu0 0
    %165 = vmatprep.subr.bf16.mxu0 0
    %166 = vmatpush1.bf16.msra.mxu0 0
    %167 = vmatprep.subr.bf16.mxu0 0
    %168 = vmatpush1.bf16.msra.mxu0 0
    %169 = vmatprep.subr.bf16.mxu0 0
    %170 = vmatpush1.bf16.msra.mxu0 0
    %171 = vmatprep.subr.bf16.mxu0 0
    %172 = vmatpush1.bf16.msra.mxu0 0
    %173 = vmatprep.subr.bf16.mxu0 0
    %174 = vmatpush1.bf16.msra.mxu0 0
    %175 = vmatprep.subr.bf16.mxu0 0
    %176 = vmatpush1.bf16.msra.mxu0 0
    %177 = vmatprep.subr.bf16.mxu0 0
    %178 = vmatpush1.bf16.msra.mxu0 0
    %179 = vmatprep.subr.bf16.mxu0 0
    %180 = vmatpush1.bf16.msra.mxu0 0
    %181 = vmatprep.subr.bf16.mxu0 0
    %182 = vmatpush1.bf16.msra.mxu0 0
    %183 = vmatprep.subr.bf16.mxu0 0
    %184 = vmatpush1.bf16.msra.mxu0 0
    %185 = vmatprep.mubr.bf16.mxu0 0
    %186 = vmatmul.mubr.bf16.gmra.mrb[0].mxu0 %v110
    %v187 = vpop.f32.mrb[0].mxu0
    %v188 = vadd.f32 0.0, %v187
    %v189 = vpop.f32.mrb[0].mxu0
    %v190 = vadd.f32 0.0, %v189
    %v191 = vpop.f32.mrb[0].mxu0
    %v192 = vpop.f32.mrb[0].mxu0
    %193 = vdwg.mxu0
    %194 = vmatprep.subr.bf16.mxu0 %v91
    %195 = vmatpush1.bf16.msra.mxu0 %v90
    %196 = vmatprep.subr.bf16.mxu0 0
    %197 = vmatpush1.bf16.msra.mxu0 0
    %198 = vmatprep.subr.bf16.mxu0 0
    %199 = vmatpush1.bf16.msra.mxu0 0
    %200 = vmatprep.subr.bf16.mxu0 0
    %201 = vmatpush1.bf16.msra.mxu0 0
    %202 = vmatprep.subr.bf16.mxu0 0
    %203 = vmatpush1.bf16.msra.mxu0 0
    %204 = vmatprep.subr.bf16.mxu0 0
    %205 = vmatpush1.bf16.msra.mxu0 0
    %206 = vmatprep.subr.bf16.mxu0 0
    %207 = vmatpush1.bf16.msra.mxu0 0
    %208 = vmatprep.subr.bf16.mxu0 0
    %209 = vmatpush1.bf16.msra.mxu0 0
    %210 = vmatprep.subr.bf16.mxu0 0
    %211 = vmatpush1.bf16.msra.mxu0 0
    %212 = vmatprep.subr.bf16.mxu0 0
    %213 = vmatpush1.bf16.msra.mxu0 0
    %214 = vmatprep.subr.bf16.mxu0 0
    %215 = vmatpush1.bf16.msra.mxu0 0
    %216 = vmatprep.subr.bf16.mxu0 0
    %217 = vmatpush1.bf16.msra.mxu0 0
    %218 = vmatprep.subr.bf16.mxu0 0
    %219 = vmatpush1.bf16.msra.mxu0 0
    %220 = vmatprep.subr.bf16.mxu0 0
    %221 = vmatpush1.bf16.msra.mxu0 0
    %222 = vmatprep.subr.bf16.mxu0 0
    %223 = vmatpush1.bf16.msra.mxu0 0
    %224 = vmatprep.subr.bf16.mxu0 0
    %225 = vmatpush1.bf16.msra.mxu0 0
    %226 = vmatprep.mubr.bf16.mxu0 0
    %227 = vmatmul.mubr.bf16.gmra.mrb[0].mxu0 %v110
    %v228 = vpop.f32.mrb[0].mxu0
    %v229 = vadd.f32 0.0, %v228
    %v230 = vpop.f32.mrb[0].mxu0
    %v231 = vadd.f32 0.0, %v230
    %v232 = vpop.f32.mrb[0].mxu0
    %v233 = vpop.f32.mrb[0].mxu0
    %234 = vdwg.mxu0
    %235 = vmatprep.subr.bf16.mxu0 %v93
    %236 = vmatpush1.bf16.msra.mxu0 %v92
    %237 = vmatprep.subr.bf16.mxu0 0
    %238 = vmatpush1.bf16.msra.mxu0 0
    %239 = vmatprep.subr.bf16.mxu0 0
    %240 = vmatpush1.bf16.msra.mxu0 0
    %241 = vmatprep.subr.bf16.mxu0 0
    %242 = vmatpush1.bf16.msra.mxu0 0
    %243 = vmatprep.subr.bf16.mxu0 0
    %244 = vmatpush1.bf16.msra.mxu0 0
    %245 = vmatprep.subr.bf16.mxu0 0
    %246 = vmatpush1.bf16.msra.mxu0 0
    %247 = vmatprep.subr.bf16.mxu0 0
    %248 = vmatpush1.bf16.msra.mxu0 0
    %249 = vmatprep.subr.bf16.mxu0 0
    %250 = vmatpush1.bf16.msra.mxu0 0
    %251 = vmatprep.subr.bf16.mxu0 0
    %252 = vmatpush1.bf16.msra.mxu0 0
    %253 = vmatprep.subr.bf16.mxu0 0
    %254 = vmatpush1.bf16.msra.mxu0 0
    %255 = vmatprep.subr.bf16.mxu0 0
    %256 = vmatpush1.bf16.msra.mxu0 0
    %257 = vmatprep.subr.bf16.mxu0 0
    %258 = vmatpush1.bf16.msra.mxu0 0
    %259 = vmatprep.subr.bf16.mxu0 0
    %260 = vmatpush1.bf16.msra.mxu0 0
    %261 = vmatprep.subr.bf16.mxu0 0
    %262 = vmatpush1.bf16.msra.mxu0 0
    %263 = vmatprep.subr.bf16.mxu0 0
    %264 = vmatpush1.bf16.msra.mxu0 0
    %265 = vmatprep.subr.bf16.mxu0 0
    %266 = vmatpush1.bf16.msra.mxu0 0
    %267 = vmatprep.mubr.bf16.mxu0 0
    %268 = vmatmul.mubr.bf16.gmra.mrb[0].mxu0 %v110
    %v269 = vpop.f32.mrb[0].mxu0
    %v270 = vadd.f32 0.0, %v269
    %v271 = vpop.f32.mrb[0].mxu0
    %v272 = vadd.f32 0.0, %v271
    %v273 = vpop.f32.mrb[0].mxu0
    %v274 = vpop.f32.mrb[0].mxu0
    %275 = vdwg.mxu0
    %276 = vmatprep.subr.bf16.mxu0 %v95
    %277 = vmatpush1.bf16.msra.mxu0 %v94
    %278 = vmatprep.subr.bf16.mxu0 0
    %279 = vmatpush1.bf16.msra.mxu0 0
    %280 = vmatprep.subr.bf16.mxu0 0
    %281 = vmatpush1.bf16.msra.mxu0 0
    %282 = vmatprep.subr.bf16.mxu0 0
    %283 = vmatpush1.bf16.msra.mxu0 0
    %284 = vmatprep.subr.bf16.mxu0 0
    %285 = vmatpush1.bf16.msra.mxu0 0
    %286 = vmatprep.subr.bf16.mxu0 0
    %287 = vmatpush1.bf16.msra.mxu0 0
    %288 = vmatprep.subr.bf16.mxu0 0
    %289 = vmatpush1.bf16.msra.mxu0 0
    %290 = vmatprep.subr.bf16.mxu0 0
    %291 = vmatpush1.bf16.msra.mxu0 0
    %292 = vmatprep.subr.bf16.mxu0 0
    %293 = vmatpush1.bf16.msra.mxu0 0
    %294 = vmatprep.subr.bf16.mxu0 0
    %295 = vmatpush1.bf16.msra.mxu0 0
    %296 = vmatprep.subr.bf16.mxu0 0
    %297 = vmatpush1.bf16.msra.mxu0 0
    %298 = vmatprep.subr.bf16.mxu0 0
    %299 = vmatpush1.bf16.msra.mxu0 0
    %300 = vmatprep.subr.bf16.mxu0 0
    %301 = vmatpush1.bf16.msra.mxu0 0
    %302 = vmatprep.subr.bf16.mxu0 0
    %303 = vmatpush1.bf16.msra.mxu0 0
    %304 = vmatprep.subr.bf16.mxu0 0
    %305 = vmatpush1.bf16.msra.mxu0 0
    %306 = vmatprep.subr.bf16.mxu0 0
    %307 = vmatpush1.bf16.msra.mxu0 0
    %308 = vmatprep.mubr.bf16.mxu0 0
    %309 = vmatmul.mubr.bf16.gmra.mrb[0].mxu0 %v110
    %v310 = vpop.f32.mrb[0].mxu0
    %v311 = vadd.f32 0.0, %v310
    %v312 = vpop.f32.mrb[0].mxu0
    %v313 = vadd.f32 0.0, %v312
    %v314 = vpop.f32.mrb[0].mxu0
    %v315 = vpop.f32.mrb[0].mxu0
    %316 = vdwg.mxu0
    %317 = vmatprep.subr.bf16.mxu0 0
    %318 = vmatpush1.bf16.msra.mxu0 %v96
    %319 = vmatprep.subr.bf16.mxu0 0
    %320 = vmatpush1.bf16.msra.mxu0 0
    %321 = vmatprep.subr.bf16.mxu0 0
    %322 = vmatpush1.bf16.msra.mxu0 0
    %323 = vmatprep.subr.bf16.mxu0 0
    %324 = vmatpush1.bf16.msra.mxu0 0
    %325 = vmatprep.subr.bf16.mxu0 0
    %326 = vmatpush1.bf16.msra.mxu0 0
    %327 = vmatprep.subr.bf16.mxu0 0
    %328 = vmatpush1.bf16.msra.mxu0 0
    %329 = vmatprep.subr.bf16.mxu0 0
    %330 = vmatpush1.bf16.msra.mxu0 0
    %331 = vmatprep.subr.bf16.mxu0 0
    %332 = vmatpush1.bf16.msra.mxu0 0
    %333 = vmatprep.subr.bf16.mxu0 0
    %334 = vmatpush1.bf16.msra.mxu0 0
    %335 = vmatprep.subr.bf16.mxu0 0
    %336 = vmatpush1.bf16.msra.mxu0 0
    %337 = vmatprep.subr.bf16.mxu0 0
    %338 = vmatpush1.bf16.msra.mxu0 0
    %339 = vmatprep.subr.bf16.mxu0 0
    %340 = vmatpush1.bf16.msra.mxu0 0
    %341 = vmatprep.subr.bf16.mxu0 0
    %342 = vmatpush1.bf16.msra.mxu0 0
    %343 = vmatprep.subr.bf16.mxu0 0
    %344 = vmatpush1.bf16.msra.mxu0 0
    %345 = vmatprep.subr.bf16.mxu0 0
    %346 = vmatpush1.bf16.msra.mxu0 0
    %347 = vmatprep.subr.bf16.mxu0 0
    %348 = vmatpush1.bf16.msra.mxu0 0
    %349 = vmatprep.mubr.bf16.mxu0 0
    %350 = vmatmul.mubr.bf16.gmra.mrb[0].mxu0 %v110
    %v351 = vpop.f32.mrb[0].mxu0
    %v352 = vadd.f32 0.0, %v351
    %v353 = vpop.f32.mrb[0].mxu0
    %v354 = vpop.f32.mrb[0].mxu0
    %v355 = vpop.f32.mrb[0].mxu0
    %356 = vdwg.mxu0
    %v357 = vpack.c.bf16 %v147, %v147
    %v358 = vpack.c.bf16 %v149, %v149
    %v359 = vpack.c.bf16 %v188, %v188
    %v360 = vpack.c.bf16 %v190, %v190
    %v361 = vpack.c.bf16 %v229, %v229
    %v362 = vpack.c.bf16 %v231, %v231
    %v363 = vpack.c.bf16 %v270, %v270
    %v364 = vpack.c.bf16 %v272, %v272
    %v365 = vpack.c.bf16 %v311, %v311
    %v366 = vpack.c.bf16 %v313, %v313
    %v367 = vpack.c.bf16 %v352, %v352
    %v379 = vcombine.low %v357, %v358
    %v380 = vcombine.low %v359, %v360
    %v381 = vcombine.low %v361, %v362
    %v382 = vcombine.low %v363, %v364
    %v384 = vunpack.c.l.s4 1966171168
    %v385 = vunpack.c.0.s8 %v384
    %v386 = vlaneseq
    %v387 = vshrl.u32 %v386, 7
    %v388 = vsub.s32 %v385, %v387
    %v389 = vrot.slane %v379, %v388
    %v391 = vunpack.c.l.s4 1966171168
    %v392 = vunpack.c.0.s8 %v391
    %v393 = vlaneseq
    %v394 = vshrl.u32 %v393, 7
    %v395 = vsub.s32 %v392, %v394
    %v396 = vrot.slane %v380, %v395
    %v398 = vunpack.c.l.s4 1966171168
    %v399 = vunpack.c.0.s8 %v398
    %v400 = vlaneseq
    %v401 = vshrl.u32 %v400, 7
    %v402 = vsub.s32 %v399, %v401
    %v403 = vrot.slane %v381, %v402
    %v405 = vunpack.c.l.s4 1966171168
    %v406 = vunpack.c.0.s8 %v405
    %v407 = vlaneseq
    %v408 = vshrl.u32 %v407, 7
    %v409 = vsub.s32 %v406, %v408
    %v410 = vrot.slane %v382, %v409
    %v411 = vcombine.low %v389, %v396
    %v412 = vcombine.low %v403, %v410
    %v414 = vunpack.c.l.s4 1966171168
    %v415 = vunpack.c.0.s8 %v414
    %v416 = vlaneseq
    %v417 = vshrl.u32 %v416, 7
    %v418 = vsub.s32 %v415, %v417
    %v419 = vrot.slane %v411, %v418
    %v421 = vunpack.c.l.s4 1966171168
    %v422 = vunpack.c.0.s8 %v421
    %v423 = vlaneseq
    %v424 = vshrl.u32 %v423, 7
    %v425 = vsub.s32 %v422, %v424
    %v426 = vrot.slane %v412, %v425
    %v427 = vcombine.low %v419, %v426
    %v428 = vcombine.low %v365, %v366
    %v430 = vunpack.c.l.s4 1966171168
    %v431 = vunpack.c.0.s8 %v430
    %v432 = vlaneseq
    %v433 = vshrl.u32 %v432, 7
    %v434 = vsub.s32 %v431, %v433
    %v435 = vrot.slane %v428, %v434
    %v437 = vunpack.c.l.s4 1966171168
    %v438 = vunpack.c.0.s8 %v437
    %v439 = vlaneseq
    %v440 = vshrl.u32 %v439, 7
    %v441 = vsub.s32 %v438, %v440
    %v442 = vrot.slane %v367, %v441
    %v443 = vcombine.low %v435, %v442
    %v445 = vunpack.c.l.s4 1966171168
    %v446 = vunpack.c.0.s8 %v445
    %v447 = vlaneseq
    %v448 = vshrl.u32 %v447, 7
    %v449 = vsub.s32 %v446, %v448
    %v450 = vrot.slane %v443, %v449
    %vm453 = vcmask 1040384
    %vm454 = vsmask.f32 256
    %vm455 = vmand %vm453, %vm454
    %vm456 = vcmask 1041409
    %vm457 = vsmask.f32 1280
    %vm458 = vmand %vm456, %vm457
    %vm459 = vmor %vm458, %vm455
    %vm460 = vcmask 1042434
    %vm461 = vsmask.f32 2304
    %vm462 = vmand %vm460, %vm461
    %vm463 = vmor %vm462, %vm459
    %vm464 = vcmask 1043459
    %vm465 = vsmask.f32 3328
    %vm466 = vmand %vm464, %vm465
    %vm467 = vmor %vm466, %vm463
    %vm468 = vcmask 1044484
    %vm469 = vsmask.f32 4352
    %vm470 = vmand %vm468, %vm469
    %vm471 = vmor %vm470, %vm467
    %vm472 = vcmask 1045509
    %vm473 = vsmask.f32 5376
    %vm474 = vmand %vm472, %vm473
    %vm475 = vmor %vm474, %vm471
    %vm476 = vcmask 1046534
    %vm477 = vsmask.f32 6400
    %vm478 = vmand %vm476, %vm477
    %vm479 = vmor %vm478, %vm475
    %vm480 = vcmask 1047559
    %vm481 = vsmask.f32 7424
    %vm482 = vmand %vm480, %vm481
    %vm483 = vmor %vm482, %vm479
    %v484 = vld [vmem:[#allocation7] sm:$0xff]
    %v485 = vsel %vm483, %v427, %v484
    %486 = vst [vmem:[#allocation7] sm:$0xff] %v485
    %v487 = vld [vmem:[#allocation7 + $0x8] sm:$0x7]
    %v488 = vsel %vm463, %v450, %v487
    %489 = vst [vmem:[#allocation7 + $0x8] sm:$0x7] %v488
    // Predicated region
    $region18: #{tpu_custom_call.1} parent=1 // pred_check
      _
    $region19: #{tpu_custom_call.1} parent=1 // pred_check_branch
      %491 = sbr.rel (0) target = $region21
    $region20: #{tpu_custom_call.1} parent=1 // pred_region
      %s493 = ssub.s32 176, 176
      %494 = vsyncadd [#allocation4], %s493
      %s496 = sshll.u32 [#allocation7], 4
      %s497 = int_to_ptr.vmem [resolvable:$true] %s496
      %499 = dma.vmem_to_hbm [thread:$0]  %s497, 176, %s2, [#allocation4]
    $region21: #{tpu_custom_call.1} parent=1 // pred_fallthru
      _
    // Predicated region
    $region22: #{tpu_custom_call.1} parent=1 // pred_check
      _
    $region23: #{tpu_custom_call.1} parent=1 // pred_check_branch
      %501 = sbr.rel (0) target = $region25
    $region24: #{tpu_custom_call.1} parent=1 // pred_region
      %502 = dma.done [#allocation4], 176
    $region25: #{tpu_custom_call.1} parent=1 // pred_fallthru
      _
    %503 = vsyncpa [#allocation3], 1
    %504 = vsyncpa [#allocation6], 1
    %505 = vsyncpa [#allocation4], 1

</llo_original>
